<compile_context>
chip_gen: v7x
topology: tpu7x:2x2x1
jax: 0.10.0
libtpu: 0.0.40
codegen_flags: <defaults>
</compile_context>

<pallas_src>
import functools

import jax
import jax.numpy as jnp
from jax import lax
from jax.experimental import pallas as pl
from jax.experimental.pallas import tpu as pltpu
import numpy as np

EPS = 1e-5  # nn.InstanceNorm2d default (affine=False, biased variance)

_OFFS = [(oy, ox) for oy in (-1, 0, 1) for ox in (-1, 0, 1)]  # tap order (dy, dx)


def _build_masks(H, W, B):
    """(8, B*HW) f32 boundary masks (center tap skipped), per-sample coords."""
    HW = H * W
    p = np.arange(B * HW) % HW          # per-sample flattened pixel index
    hh = p // W
    ww = p % W
    rows = []
    for oy, ox in _OFFS:
        if oy == 0 and ox == 0:
            continue
        ok = np.ones(B * HW, dtype=bool)
        if oy == -1:
            ok &= hh >= 1
        if oy == 1:
            ok &= hh <= H - 2
        if ox == -1:
            ok &= ww >= 1
        if ox == 1:
            ok &= ww <= W - 2
        rows.append(ok)
    return jnp.asarray(np.stack(rows).astype(np.float32))


def block_kernel(x_ref, m_ref, w1_ref, w2_ref, o_ref, *, H, W, B):
    # x_ref : (1, C, B*HW)  input block (also the residual)
    # m_ref : (8, B*HW)     precomputed boundary masks (center tap omitted)
    # w1_ref: (C, 9*C + 1)  conv1 weights with bias folded in as last column
    # w2_ref: (C, 9*C + 1)  conv2 weights + bias column
    # o_ref : (1, C, B*HW)
    C = x_ref.shape[1]
    HW = H * W
    L = B * HW
    inv_hw = 1.0 / float(HW)

    masks = m_ref[...]                       # (8, L), loaded once, reused by both convs
    ones_row = jnp.ones((1, L), jnp.float32)  # bias row of the im2col patch

    def conv3x3(y, w_ref):
        # 9 XLU rolls (+ boundary masking) -> concat -> ONE MXU matmul.
        taps = []
        mi = 0
        for oy, ox in _OFFS:
            sh = (-(oy * W + ox)) % L
            tap = y if sh == 0 else pltpu.roll(y, shift=sh, axis=1)
            if not (oy == 0 and ox == 0):
                tap = tap * masks[mi:mi + 1, :]   # zero wrapped / out-of-image lanes
                mi += 1
            taps.append(tap)
        taps.append(ones_row)                     # folded bias
        patches = jnp.concatenate(taps, axis=0)   # (9C+1, L), kept in vregs
        return jnp.dot(w_ref[...], patches, preferred_element_type=jnp.float32)

    def inst_norm_relu(y):
        # Per-sample, per-channel InstanceNorm (biased variance) + ReLU.
        # sum and sum-of-squares fused into a single cross-lane reduce.
        parts = []
        for s in range(B):
            ys = y[:, s * HW:(s + 1) * HW]                        # (C, HW)
            stats = jnp.sum(jnp.concatenate([ys, ys * ys], axis=0),
                            axis=1, keepdims=True)                # (2C, 1)
            mean = stats[:C] * inv_hw
            var = stats[C:] * inv_hw - mean * mean
            parts.append(jnp.maximum((ys - mean) * lax.rsqrt(var + EPS), 0.0))
        return parts[0] if B == 1 else jnp.concatenate(parts, axis=1)

    x = x_ref[0].astype(jnp.float32)             # (C, L); also the residual

    y = inst_norm_relu(conv3x3(x, w1_ref))       # conv1 -> IN -> ReLU
    y = inst_norm_relu(conv3x3(y, w2_ref))       # conv2 -> IN -> ReLU

    o_ref[0] = jnp.maximum(y + x, 0.0).astype(o_ref.dtype)   # residual + ReLU


def block_forward(x_nchw, w1, b1, w2, b2, samples_per_step=None):
    """x_nchw: (N, C, H, W) float32. Conv weights HWIO (3,3,Cin,Cout), biases (Cout,).
    Returns (N, C, H, W)."""
    N, C, H, W = x_nchw.shape
    Cout = w1.shape[-1]
    assert C == Cout, "residual Block requires in_features == out_features"
    HW = H * W

    if samples_per_step is None:
        # Fold samples into each step to amortize per-step overhead, but keep the
        # grid length >= 2 when possible so both v7x TensorCores stay busy.
        samples_per_step = N // 2 if (N >= 4 and N % 2 == 0) else 1
    B = samples_per_step
    assert N % B == 0, "samples_per_step must divide the batch"
    G = N // B
    L = B * HW

    # (N, C, H, W) -> (G, C, B*HW): samples of a group concatenated along lanes.
    x2 = x_nchw.reshape(G, B, C, HW).transpose(0, 2, 1, 3).reshape(G, C, L)

    # HWIO (3,3,Cin,Cout) -> (Cout, 9*Cin) with column order (dy, dx, ci),
    # then append the bias as an extra column (matmul contraction = 9C+1).
    w1_2d = jnp.concatenate(
        [jnp.transpose(w1, (3, 0, 1, 2)).reshape(Cout, 9 * C), b1.reshape(Cout, 1)],
        axis=1)
    w2_2d = jnp.concatenate(
        [jnp.transpose(w2, (3, 0, 1, 2)).reshape(Cout, 9 * Cout), b2.reshape(Cout, 1)],
        axis=1)

    masks = _build_masks(H, W, B)                 # (8, L) f32, built once

    out = pl.pallas_call(
        functools.partial(block_kernel, H=H, W=W, B=B),
        out_shape=jax.ShapeDtypeStruct((G, Cout, L), x_nchw.dtype),
        grid_spec=pltpu.PrefetchScalarGridSpec(
            num_scalar_prefetch=0,
            grid=(G,),
            in_specs=[
                pl.BlockSpec((1, C, L), lambda n: (n, 0, 0)),
                pl.BlockSpec((8, L), lambda n: (0, 0)),
                pl.BlockSpec((Cout, 9 * C + 1), lambda n: (0, 0)),
                pl.BlockSpec((Cout, 9 * Cout + 1), lambda n: (0, 0)),
            ],
            out_specs=pl.BlockSpec((1, Cout, L), lambda n: (n, 0, 0)),
        ),
        compiler_params=pltpu.CompilerParams(
            dimension_semantics=("parallel",)),
    )(x2, masks, w1_2d, w2_2d)

    return (out.reshape(G, Cout, B, HW)
               .transpose(0, 2, 1, 3)
               .reshape(N, Cout, H, W))


def block_reference(x_nchw, w1, b1, w2, b2):
    """Plain-JAX reference (mirrors the PyTorch forward) for validation."""
    def conv(x, w, b):  # NCHW input, HWIO weights
        y = lax.conv_general_dilated(
            x, w, window_strides=(1, 1), padding="SAME",
            dimension_numbers=("NCHW", "HWIO", "NCHW"),
            precision=lax.Precision.HIGHEST)
        return y + b[None, :, None, None]

    def inorm(y):
        mean = jnp.mean(y, axis=(2, 3), keepdims=True)
        var = jnp.mean((y - mean) ** 2, axis=(2, 3), keepdims=True)
        return (y - mean) / jnp.sqrt(var + EPS)

    y = jax.nn.relu(inorm(conv(x_nchw, w1, b1)))
    y = jax.nn.relu(inorm(conv(y, w2, b2)))
    return jax.nn.relu(y + x_nchw)


if __name__ == "__main__":
    key = jax.random.PRNGKey(0)
    k_x, k_w1, k_b1, k_w2, k_b2, k_x4 = jax.random.split(key, 6)

    N, C, H, W = 2, 4, 16, 16  # in_features == out_features (residual block)
    x = jax.random.normal(k_x, (N, C, H, W), dtype=jnp.float32)

    # Deterministic synthetic parameters (Conv2d has bias by default).
    fan_in = 3 * 3 * C
    scale = 1.0 / np.sqrt(fan_in)
    w1 = jax.random.uniform(k_w1, (3, 3, C, C), jnp.float32, -scale, scale)
    b1 = jax.random.uniform(k_b1, (C,), jnp.float32, -scale, scale)
    w2 = jax.random.uniform(k_w2, (3, 3, C, C), jnp.float32, -scale, scale)
    b2 = jax.random.uniform(k_b2, (C,), jnp.float32, -scale, scale)

    # Main config: N=2 -> 1 sample/step, grid=(2,) ("parallel" feeds both v7x TCs).
    out = block_forward(x, w1, b1, w2, b2)
    jax.block_until_ready(out)
    ref = block_reference(x, w1, b1, w2, b2)
    np.testing.assert_allclose(np.asarray(out), np.asarray(ref), rtol=2e-3, atol=2e-3)

    # Also exercise the lane-batched path: N=4 -> 2 samples/step, grid=(2,).
    x4 = jax.random.normal(k_x4, (4, C, H, W), dtype=jnp.float32)
    out4 = block_forward(x4, w1, b1, w2, b2)
    jax.block_until_ready(out4)
    ref4 = block_reference(x4, w1, b1, w2, b2)
    np.testing.assert_allclose(np.asarray(out4), np.asarray(ref4), rtol=2e-3, atol=2e-3)

    print("KERNEL_OK")
</pallas_src>

<mosaic_0001>
module attributes {stable_mosaic.version = 11 : i64} {
  func.func @block_kernel(%arg0: i32, %arg1: memref<1x4x256xf32, #tpu.memory_space<vmem>>, %arg2: memref<8x256xf32, #tpu.memory_space<vmem>>, %arg3: memref<4x37xf32, #tpu.memory_space<vmem>>, %arg4: memref<4x37xf32, #tpu.memory_space<vmem>>, %arg5: memref<1x4x256xf32, #tpu.memory_space<vmem>>) attributes {dimension_semantics = [#tpu.dimension_semantics<parallel>], iteration_bounds = array<i64: 2>, scalar_prefetch = 0 : i64, scratch_operands = 0 : i64, tpu.core_type = #tpu.core_type<tc>, window_params = [{transform_indices = @transform_0, window_bounds = array<i64: 1, 4, 256>}, {pipeline_mode = #tpu.pipeline_mode<synchronous>, transform_indices = @transform_1, window_bounds = array<i64: 8, 256>}, {pipeline_mode = #tpu.pipeline_mode<synchronous>, transform_indices = @transform_2, window_bounds = array<i64: 4, 37>}, {pipeline_mode = #tpu.pipeline_mode<synchronous>, transform_indices = @transform_3, window_bounds = array<i64: 4, 37>}, {transform_indices = @transform_4, window_bounds = array<i64: 1, 4, 256>}]} {
    %c0 = arith.constant 0 : index
    %c0_0 = arith.constant 0 : index
    %0 = vector.load %arg2[%c0, %c0_0] : memref<8x256xf32, #tpu.memory_space<vmem>>, vector<8x256xf32>
    %cst = arith.constant 1.000000e+00 : f32
    %1 = vector.broadcast %cst : f32 to vector<1x256xf32>
    %c0_1 = arith.constant 0 : index
    %c0_2 = arith.constant 0 : index
    %c0_3 = arith.constant 0 : index
    %2 = vector.load %arg1[%c0_1, %c0_2, %c0_3] : memref<1x4x256xf32, #tpu.memory_space<vmem>>, vector<1x4x256xf32>
    %3 = vector.shape_cast %2 : vector<1x4x256xf32> to vector<4x256xf32>
    %c17_i32 = arith.constant 17 : i32
    %4 = tpu.dynamic_rotate %3 by %c17_i32 dim 1 : vector<4x256xf32>, i32 -> vector<4x256xf32>
    %5 = vector.extract_strided_slice %0 {offsets = [0, 0], sizes = [1, 256], strides = [1, 1]} : vector<8x256xf32> to vector<1x256xf32>
    %6 = vector.broadcast %5 : vector<1x256xf32> to vector<4x256xf32>
    %7 = arith.mulf %4, %6 : vector<4x256xf32>
    %c16_i32 = arith.constant 16 : i32
    %8 = tpu.dynamic_rotate %3 by %c16_i32 dim 1 : vector<4x256xf32>, i32 -> vector<4x256xf32>
    %9 = vector.extract_strided_slice %0 {offsets = [1, 0], sizes = [1, 256], strides = [1, 1]} : vector<8x256xf32> to vector<1x256xf32>
    %10 = vector.broadcast %9 : vector<1x256xf32> to vector<4x256xf32>
    %11 = arith.mulf %8, %10 : vector<4x256xf32>
    %c15_i32 = arith.constant 15 : i32
    %12 = tpu.dynamic_rotate %3 by %c15_i32 dim 1 : vector<4x256xf32>, i32 -> vector<4x256xf32>
    %13 = vector.extract_strided_slice %0 {offsets = [2, 0], sizes = [1, 256], strides = [1, 1]} : vector<8x256xf32> to vector<1x256xf32>
    %14 = vector.broadcast %13 : vector<1x256xf32> to vector<4x256xf32>
    %15 = arith.mulf %12, %14 : vector<4x256xf32>
    %c1_i32 = arith.constant 1 : i32
    %16 = tpu.dynamic_rotate %3 by %c1_i32 dim 1 : vector<4x256xf32>, i32 -> vector<4x256xf32>
    %17 = vector.extract_strided_slice %0 {offsets = [3, 0], sizes = [1, 256], strides = [1, 1]} : vector<8x256xf32> to vector<1x256xf32>
    %18 = vector.broadcast %17 : vector<1x256xf32> to vector<4x256xf32>
    %19 = arith.mulf %16, %18 : vector<4x256xf32>
    %c255_i32 = arith.constant 255 : i32
    %20 = tpu.dynamic_rotate %3 by %c255_i32 dim 1 : vector<4x256xf32>, i32 -> vector<4x256xf32>
    %21 = vector.extract_strided_slice %0 {offsets = [4, 0], sizes = [1, 256], strides = [1, 1]} : vector<8x256xf32> to vector<1x256xf32>
    %22 = vector.broadcast %21 : vector<1x256xf32> to vector<4x256xf32>
    %23 = arith.mulf %20, %22 : vector<4x256xf32>
    %c241_i32 = arith.constant 241 : i32
    %24 = tpu.dynamic_rotate %3 by %c241_i32 dim 1 : vector<4x256xf32>, i32 -> vector<4x256xf32>
    %25 = vector.extract_strided_slice %0 {offsets = [5, 0], sizes = [1, 256], strides = [1, 1]} : vector<8x256xf32> to vector<1x256xf32>
    %26 = vector.broadcast %25 : vector<1x256xf32> to vector<4x256xf32>
    %27 = arith.mulf %24, %26 : vector<4x256xf32>
    %c240_i32 = arith.constant 240 : i32
    %28 = tpu.dynamic_rotate %3 by %c240_i32 dim 1 : vector<4x256xf32>, i32 -> vector<4x256xf32>
    %29 = vector.extract_strided_slice %0 {offsets = [6, 0], sizes = [1, 256], strides = [1, 1]} : vector<8x256xf32> to vector<1x256xf32>
    %30 = vector.broadcast %29 : vector<1x256xf32> to vector<4x256xf32>
    %31 = arith.mulf %28, %30 : vector<4x256xf32>
    %c239_i32 = arith.constant 239 : i32
    %32 = tpu.dynamic_rotate %3 by %c239_i32 dim 1 : vector<4x256xf32>, i32 -> vector<4x256xf32>
    %33 = vector.extract_strided_slice %0 {offsets = [7, 0], sizes = [1, 256], strides = [1, 1]} : vector<8x256xf32> to vector<1x256xf32>
    %34 = vector.broadcast %33 : vector<1x256xf32> to vector<4x256xf32>
    %35 = arith.mulf %32, %34 : vector<4x256xf32>
    %36 = tpu.concatenate %7, %11, %15, %19, %3, %23, %27, %31, %35, %1 in 0 : vector<4x256xf32>, vector<4x256xf32>, vector<4x256xf32>, vector<4x256xf32>, vector<4x256xf32>, vector<4x256xf32>, vector<4x256xf32>, vector<4x256xf32>, vector<4x256xf32>, vector<1x256xf32> -> vector<37x256xf32>
    %c0_4 = arith.constant 0 : index
    %c0_5 = arith.constant 0 : index
    %37 = vector.load %arg3[%c0_4, %c0_5] : memref<4x37xf32, #tpu.memory_space<vmem>>, vector<4x37xf32>
    %cst_6 = arith.constant dense<0.000000e+00> : vector<4x256xf32>
    %38 = tpu.matmul %37, %36, %cst_6 {dimension_numbers = #tpu.dot_dimension_numbers<[1], [0], [0], [1], [0, 0, 1, 1], [], []>} : vector<4x37xf32>, vector<37x256xf32>, vector<4x256xf32> -> vector<4x256xf32>
    %39 = arith.mulf %38, %38 : vector<4x256xf32>
    %40 = tpu.concatenate %38, %39 in 0 : vector<4x256xf32>, vector<4x256xf32> -> vector<8x256xf32>
    %cst_7 = arith.constant dense<0.000000e+00> : vector<8xf32>
    %41 = vector.multi_reduction <add>, %40, %cst_7 [1] : vector<8x256xf32> to vector<8xf32>
    %42 = vector.shape_cast %41 : vector<8xf32> to vector<8x1xf32>
    %43 = vector.extract_strided_slice %42 {offsets = [0, 0], sizes = [4, 1], strides = [1, 1]} : vector<8x1xf32> to vector<4x1xf32>
    %cst_8 = arith.constant 3.906250e-03 : f32
    %44 = vector.broadcast %cst_8 : f32 to vector<4x1xf32>
    %45 = arith.mulf %43, %44 : vector<4x1xf32>
    %46 = vector.extract_strided_slice %42 {offsets = [4, 0], sizes = [4, 1], strides = [1, 1]} : vector<8x1xf32> to vector<4x1xf32>
    %cst_9 = arith.constant 3.906250e-03 : f32
    %47 = vector.broadcast %cst_9 : f32 to vector<4x1xf32>
    %48 = arith.mulf %46, %47 : vector<4x1xf32>
    %49 = arith.mulf %45, %45 : vector<4x1xf32>
    %50 = arith.subf %48, %49 : vector<4x1xf32>
    %51 = vector.broadcast %45 : vector<4x1xf32> to vector<4x256xf32>
    %52 = arith.subf %38, %51 : vector<4x256xf32>
    %cst_10 = arith.constant 9.99999974E-6 : f32
    %53 = vector.broadcast %cst_10 : f32 to vector<4x1xf32>
    %54 = arith.addf %50, %53 : vector<4x1xf32>
    %55 = math.rsqrt %54 : vector<4x1xf32>
    %56 = vector.broadcast %55 : vector<4x1xf32> to vector<4x256xf32>
    %57 = arith.mulf %52, %56 : vector<4x256xf32>
    %cst_11 = arith.constant 0.000000e+00 : f32
    %58 = vector.broadcast %cst_11 : f32 to vector<4x256xf32>
    %59 = arith.maximumf %57, %58 : vector<4x256xf32>
    %c17_i32_12 = arith.constant 17 : i32
    %60 = tpu.dynamic_rotate %59 by %c17_i32_12 dim 1 : vector<4x256xf32>, i32 -> vector<4x256xf32>
    %61 = vector.extract_strided_slice %0 {offsets = [0, 0], sizes = [1, 256], strides = [1, 1]} : vector<8x256xf32> to vector<1x256xf32>
    %62 = vector.broadcast %61 : vector<1x256xf32> to vector<4x256xf32>
    %63 = arith.mulf %60, %62 : vector<4x256xf32>
    %c16_i32_13 = arith.constant 16 : i32
    %64 = tpu.dynamic_rotate %59 by %c16_i32_13 dim 1 : vector<4x256xf32>, i32 -> vector<4x256xf32>
    %65 = vector.extract_strided_slice %0 {offsets = [1, 0], sizes = [1, 256], strides = [1, 1]} : vector<8x256xf32> to vector<1x256xf32>
    %66 = vector.broadcast %65 : vector<1x256xf32> to vector<4x256xf32>
    %67 = arith.mulf %64, %66 : vector<4x256xf32>
    %c15_i32_14 = arith.constant 15 : i32
    %68 = tpu.dynamic_rotate %59 by %c15_i32_14 dim 1 : vector<4x256xf32>, i32 -> vector<4x256xf32>
    %69 = vector.extract_strided_slice %0 {offsets = [2, 0], sizes = [1, 256], strides = [1, 1]} : vector<8x256xf32> to vector<1x256xf32>
    %70 = vector.broadcast %69 : vector<1x256xf32> to vector<4x256xf32>
    %71 = arith.mulf %68, %70 : vector<4x256xf32>
    %c1_i32_15 = arith.constant 1 : i32
    %72 = tpu.dynamic_rotate %59 by %c1_i32_15 dim 1 : vector<4x256xf32>, i32 -> vector<4x256xf32>
    %73 = vector.extract_strided_slice %0 {offsets = [3, 0], sizes = [1, 256], strides = [1, 1]} : vector<8x256xf32> to vector<1x256xf32>
    %74 = vector.broadcast %73 : vector<1x256xf32> to vector<4x256xf32>
    %75 = arith.mulf %72, %74 : vector<4x256xf32>
    %c255_i32_16 = arith.constant 255 : i32
    %76 = tpu.dynamic_rotate %59 by %c255_i32_16 dim 1 : vector<4x256xf32>, i32 -> vector<4x256xf32>
    %77 = vector.extract_strided_slice %0 {offsets = [4, 0], sizes = [1, 256], strides = [1, 1]} : vector<8x256xf32> to vector<1x256xf32>
    %78 = vector.broadcast %77 : vector<1x256xf32> to vector<4x256xf32>
    %79 = arith.mulf %76, %78 : vector<4x256xf32>
    %c241_i32_17 = arith.constant 241 : i32
    %80 = tpu.dynamic_rotate %59 by %c241_i32_17 dim 1 : vector<4x256xf32>, i32 -> vector<4x256xf32>
    %81 = vector.extract_strided_slice %0 {offsets = [5, 0], sizes = [1, 256], strides = [1, 1]} : vector<8x256xf32> to vector<1x256xf32>
    %82 = vector.broadcast %81 : vector<1x256xf32> to vector<4x256xf32>
    %83 = arith.mulf %80, %82 : vector<4x256xf32>
    %c240_i32_18 = arith.constant 240 : i32
    %84 = tpu.dynamic_rotate %59 by %c240_i32_18 dim 1 : vector<4x256xf32>, i32 -> vector<4x256xf32>
    %85 = vector.extract_strided_slice %0 {offsets = [6, 0], sizes = [1, 256], strides = [1, 1]} : vector<8x256xf32> to vector<1x256xf32>
    %86 = vector.broadcast %85 : vector<1x256xf32> to vector<4x256xf32>
    %87 = arith.mulf %84, %86 : vector<4x256xf32>
    %c239_i32_19 = arith.constant 239 : i32
    %88 = tpu.dynamic_rotate %59 by %c239_i32_19 dim 1 : vector<4x256xf32>, i32 -> vector<4x256xf32>
    %89 = vector.extract_strided_slice %0 {offsets = [7, 0], sizes = [1, 256], strides = [1, 1]} : vector<8x256xf32> to vector<1x256xf32>
    %90 = vector.broadcast %89 : vector<1x256xf32> to vector<4x256xf32>
    %91 = arith.mulf %88, %90 : vector<4x256xf32>
    %92 = tpu.concatenate %63, %67, %71, %75, %59, %79, %83, %87, %91, %1 in 0 : vector<4x256xf32>, vector<4x256xf32>, vector<4x256xf32>, vector<4x256xf32>, vector<4x256xf32>, vector<4x256xf32>, vector<4x256xf32>, vector<4x256xf32>, vector<4x256xf32>, vector<1x256xf32> -> vector<37x256xf32>
    %c0_20 = arith.constant 0 : index
    %c0_21 = arith.constant 0 : index
    %93 = vector.load %arg4[%c0_20, %c0_21] : memref<4x37xf32, #tpu.memory_space<vmem>>, vector<4x37xf32>
    %cst_22 = arith.constant dense<0.000000e+00> : vector<4x256xf32>
    %94 = tpu.matmul %93, %92, %cst_22 {dimension_numbers = #tpu.dot_dimension_numbers<[1], [0], [0], [1], [0, 0, 1, 1], [], []>} : vector<4x37xf32>, vector<37x256xf32>, vector<4x256xf32> -> vector<4x256xf32>
    %95 = arith.mulf %94, %94 : vector<4x256xf32>
    %96 = tpu.concatenate %94, %95 in 0 : vector<4x256xf32>, vector<4x256xf32> -> vector<8x256xf32>
    %cst_23 = arith.constant dense<0.000000e+00> : vector<8xf32>
    %97 = vector.multi_reduction <add>, %96, %cst_23 [1] : vector<8x256xf32> to vector<8xf32>
    %98 = vector.shape_cast %97 : vector<8xf32> to vector<8x1xf32>
    %99 = vector.extract_strided_slice %98 {offsets = [0, 0], sizes = [4, 1], strides = [1, 1]} : vector<8x1xf32> to vector<4x1xf32>
    %cst_24 = arith.constant 3.906250e-03 : f32
    %100 = vector.broadcast %cst_24 : f32 to vector<4x1xf32>
    %101 = arith.mulf %99, %100 : vector<4x1xf32>
    %102 = vector.extract_strided_slice %98 {offsets = [4, 0], sizes = [4, 1], strides = [1, 1]} : vector<8x1xf32> to vector<4x1xf32>
    %cst_25 = arith.constant 3.906250e-03 : f32
    %103 = vector.broadcast %cst_25 : f32 to vector<4x1xf32>
    %104 = arith.mulf %102, %103 : vector<4x1xf32>
    %105 = arith.mulf %101, %101 : vector<4x1xf32>
    %106 = arith.subf %104, %105 : vector<4x1xf32>
    %107 = vector.broadcast %101 : vector<4x1xf32> to vector<4x256xf32>
    %108 = arith.subf %94, %107 : vector<4x256xf32>
    %cst_26 = arith.constant 9.99999974E-6 : f32
    %109 = vector.broadcast %cst_26 : f32 to vector<4x1xf32>
    %110 = arith.addf %106, %109 : vector<4x1xf32>
    %111 = math.rsqrt %110 : vector<4x1xf32>
    %112 = vector.broadcast %111 : vector<4x1xf32> to vector<4x256xf32>
    %113 = arith.mulf %108, %112 : vector<4x256xf32>
    %cst_27 = arith.constant 0.000000e+00 : f32
    %114 = vector.broadcast %cst_27 : f32 to vector<4x256xf32>
    %115 = arith.maximumf %113, %114 : vector<4x256xf32>
    %116 = arith.addf %115, %3 : vector<4x256xf32>
    %cst_28 = arith.constant 0.000000e+00 : f32
    %117 = vector.broadcast %cst_28 : f32 to vector<4x256xf32>
    %118 = arith.maximumf %116, %117 : vector<4x256xf32>
    %c0_29 = arith.constant 0 : index
    %c0_30 = arith.constant 0 : index
    %c0_31 = arith.constant 0 : index
    %119 = vector.load %arg5[%c0_29, %c0_30, %c0_31] : memref<1x4x256xf32, #tpu.memory_space<vmem>>, vector<1x4x256xf32>
    %120 = vector.shape_cast %119 : vector<1x4x256xf32> to vector<4x256xf32>
    %121 = vector.shape_cast %118 : vector<4x256xf32> to vector<1x4x256xf32>
    tpu.vector_store %arg5[%c0_29, %c0_30, %c0_31], %121 {strides = array<i32>} : memref<1x4x256xf32, #tpu.memory_space<vmem>>, vector<1x4x256xf32>,
    return
  }
  func.func @transform_0(%arg0: i32) -> (i32, i32, i32) {
    %c0_i32 = arith.constant 0 : i32
    %c0_i32_0 = arith.constant 0 : i32
    %c0_i32_1 = arith.constant 0 : i32
    return %arg0, %c0_i32, %c0_i32_0 : i32, i32, i32
  }
  func.func @transform_1(%arg0: i32) -> (i32, i32) {
    %c0_i32 = arith.constant 0 : i32
    %c0_i32_0 = arith.constant 0 : i32
    %c0_i32_1 = arith.constant 0 : i32
    return %c0_i32, %c0_i32_0 : i32, i32
  }
  func.func @transform_2(%arg0: i32) -> (i32, i32) {
    %c0_i32 = arith.constant 0 : i32
    %c0_i32_0 = arith.constant 0 : i32
    %c0_i32_1 = arith.constant 0 : i32
    return %c0_i32, %c0_i32_0 : i32, i32
  }
  func.func @transform_3(%arg0: i32) -> (i32, i32) {
    %c0_i32 = arith.constant 0 : i32
    %c0_i32_0 = arith.constant 0 : i32
    %c0_i32_1 = arith.constant 0 : i32
    return %c0_i32, %c0_i32_0 : i32, i32
  }
  func.func @transform_4(%arg0: i32) -> (i32, i32, i32) {
    %c0_i32 = arith.constant 0 : i32
    %c0_i32_0 = arith.constant 0 : i32
    %c0_i32_1 = arith.constant 0 : i32
    return %arg0, %c0_i32, %c0_i32_0 : i32, i32, i32
  }
}

</mosaic_0001>

<llo_original>
// kernel: tpu_custom_call.1
$region0: #{tpu_custom_call.1}
  #allocation0 [shape = 'u32[]', space=smem, size = 0x4, offset = 0x4, fixed_abs, tag = 'smem constant byte address 0x4 - core index']
  #allocation1 [shape = 'u32[144,128]{1,0:T(1,128)}', space=vmem, size = 0x12000, scoped, tag = 'internal scratch']
  %s0 = inlined_call_operand.hbm [shape: f32[2,4,256], index: 0, kind: input, shape index: {}]
  %s1 = inlined_call_operand.hbm [shape: f32[8,256], index: 1, kind: input, shape index: {}]
  %s2 = inlined_call_operand.vmem [shape: f32[4,37], index: 2, kind: input, shape index: {}]
  %s3 = inlined_call_operand.vmem [shape: f32[4,37], index: 3, kind: input, shape index: {}]
  %s4 = inlined_call_operand.hbm [shape: f32[2,4,256], index: 4, kind: output, shape index: {}]
  %s5 = sld [smem:[#allocation0]]
  $region57: #{tpu_custom_call.1} parent=0
    _
  %s7 = ssub.s32 1, %s5
  %s8 = scalar_select 0, %s7, %s5
  $region1: #{tpu_custom_call.1} parent=0
    #allocation2 [shape = 'u8[8192]{0}', space=vmem, size = 0x2000, scoped, tag = 'input window, operand 0']
    #allocation3 [shape = 's32[2]{0}', space=sflag, size = 0x8, scoped, tag = 'scoped memory for tpu_custom_call.1']
    #allocation4 [shape = 's32[2]{0}', space=sflag, size = 0x8, scoped, tag = 'scoped memory for tpu_custom_call.1']
    #allocation5 [shape = 'u8[8192]{0}', space=vmem, size = 0x2000, scoped, tag = 'input window, operand 1, single buffered']
    #allocation6 [shape = 's32[1]{0}', space=sflag, size = 0x4, scoped, tag = 'scoped memory for tpu_custom_call.1']
    #allocation7 [shape = 'u8[8192]{0}', space=vmem, size = 0x2000, scoped, tag = 'output window, operand 0']
    %9 = vsyncpa [#allocation3], 0
    %s10 = scalar_lea.sflag [#allocation3], 1
    %11 = vsyncpa %s10, 0
    %12 = vsyncpa [#allocation6], 0
    %13 = vsyncpa [#allocation4], 0
    %s14 = scalar_lea.sflag [#allocation4], 1
    %15 = vsyncpa %s14, 0
    loop: start=0, step=1, limit=4
    $region2: #{tpu_custom_call.1} parent=1 // loop_pre_header
      _
    $region3: #{tpu_custom_call.1} parent=1 // loop_header
      %s17 = sphi 0, %s21
      %p18 = scmp.ge.s32.totalorder %s17, 4
      %s27 = sphi 0, %s29
      %s30 = sphi 0, %s27
      %s31 = sphi 0, %s30
      %s47 = sphi 0, %s31
      %s51 = sphi 0, %s51
      %s53 = sphi 0, %s51
      %s54 = sphi 0, %s53
      %s68 = sphi 0, %s54
      %s72 = sphi 0, %s72
      %s74 = sphi 0, %s72
      %s75 = sphi 0, %s74
      %s89 = sphi 0, %s75
      %s93 = sphi 0, %s93
      %s95 = sphi 0, %s93
      %s96 = sphi 0, %s95
      %s110 = sphi 0, %s96
      %s116 = sphi 0, %s118
      %s119 = sphi 0, %s116
      %s120 = sphi 0, %s119
      %s136 = sphi 0, %s120
    $region4: #{tpu_custom_call.1} parent=1 // loop_header_branch
      %20 = sbr.rel (%p18) target = $region8
    $region5: #{tpu_custom_call.1} parent=1 // loop_body
      %s22 = ssub.s32 %s17, 1
      %s23 = ssub.s32 %s17, 2
      %s24 = sadd.s32 %s17, 1
      %s25 = ssub.s32 %s17, %s24
      %p26 = scmp.eq.s32.totalorder %s25, 0
      %s28 = sadd.s32 %s27, 1
      %s29 = scalar_select %p26, %s27, %s28
      %p32 = pneg %p26
      %p33 = scmp.eq.s32.totalorder %s17, 1
      %p34 = por %p32, %p33
      %p35 = scmp.ne.s32.totalorder %s27, %s30
      %p36 = scmp.eq.s32.totalorder %s17, 0
      %p37 = por %p35, %p36
      %p38 = scmp.ne.s32.totalorder %s27, %s30
      %p39 = scmp.eq.s32.totalorder %s22, 1
      %p40 = por %p38, %p39
      %p41 = scmp.ne.s32.totalorder %s30, %s31
      %p42 = scmp.eq.s32.totalorder %s22, 0
      %p43 = por %p41, %p42
      %p44 = scmp.ne.s32.totalorder %s30, %s31
      %p45 = scmp.eq.s32.totalorder %s23, 1
      %p46 = por %p44, %p45
      %p48 = scmp.ne.s32.totalorder %s31, %s47
      %p49 = scmp.eq.s32.totalorder %s23, 0
      %p50 = por %p48, %p49
      %s52 = sadd.s32 %s51, 1
      %p55 = scmp.eq.s32.totalorder %s17, 1
      %p56 = scmp.ne.s32.totalorder %s51, %s53
      %p57 = scmp.eq.s32.totalorder %s17, 0
      %p58 = por %p56, %p57
      %p59 = scmp.ne.s32.totalorder %s51, %s53
      %p60 = scmp.eq.s32.totalorder %s22, 1
      %p61 = por %p59, %p60
      %p62 = scmp.ne.s32.totalorder %s53, %s54
      %p63 = scmp.eq.s32.totalorder %s22, 0
      %p64 = por %p62, %p63
      %p65 = scmp.ne.s32.totalorder %s53, %s54
      %p66 = scmp.eq.s32.totalorder %s23, 1
      %p67 = por %p65, %p66
      %p69 = scmp.ne.s32.totalorder %s54, %s68
      %p70 = scmp.eq.s32.totalorder %s23, 0
      %p71 = por %p69, %p70
      %s73 = sadd.s32 %s72, 1
      %p76 = scmp.eq.s32.totalorder %s17, 1
      %p77 = scmp.ne.s32.totalorder %s72, %s74
      %p78 = scmp.eq.s32.totalorder %s17, 0
      %p79 = por %p77, %p78
      %p80 = scmp.ne.s32.totalorder %s72, %s74
      %p81 = scmp.eq.s32.totalorder %s22, 1
      %p82 = por %p80, %p81
      %p83 = scmp.ne.s32.totalorder %s74, %s75
      %p84 = scmp.eq.s32.totalorder %s22, 0
      %p85 = por %p83, %p84
      %p86 = scmp.ne.s32.totalorder %s74, %s75
      %p87 = scmp.eq.s32.totalorder %s23, 1
      %p88 = por %p86, %p87
      %p90 = scmp.ne.s32.totalorder %s75, %s89
      %p91 = scmp.eq.s32.totalorder %s23, 0
      %p92 = por %p90, %p91
      %s94 = sadd.s32 %s93, 1
      %p97 = scmp.eq.s32.totalorder %s17, 1
      %p98 = scmp.ne.s32.totalorder %s93, %s95
      %p99 = scmp.eq.s32.totalorder %s17, 0
      %p100 = por %p98, %p99
      %p101 = scmp.ne.s32.totalorder %s93, %s95
      %p102 = scmp.eq.s32.totalorder %s22, 1
      %p103 = por %p101, %p102
      %p104 = scmp.ne.s32.totalorder %s95, %s96
      %p105 = scmp.eq.s32.totalorder %s22, 0
      %p106 = por %p104, %p105
      %p107 = scmp.ne.s32.totalorder %s95, %s96
      %p108 = scmp.eq.s32.totalorder %s23, 1
      %p109 = por %p107, %p108
      %p111 = scmp.ne.s32.totalorder %s96, %s110
      %p112 = scmp.eq.s32.totalorder %s23, 0
      %p113 = por %p111, %p112
      %s114 = ssub.s32 %s17, %s24
      %p115 = scmp.eq.s32.totalorder %s114, 0
      %s117 = sadd.s32 %s116, 1
      %s118 = scalar_select %p115, %s116, %s117
      %p121 = pneg %p115
      %p122 = scmp.eq.s32.totalorder %s17, 1
      %p123 = por %p121, %p122
      %p124 = scmp.ne.s32.totalorder %s116, %s119
      %p125 = scmp.eq.s32.totalorder %s17, 0
      %p126 = por %p124, %p125
      %p127 = scmp.ne.s32.totalorder %s116, %s119
      %p128 = scmp.eq.s32.totalorder %s22, 1
      %p129 = por %p127, %p128
      %p130 = scmp.ne.s32.totalorder %s119, %s120
      %p131 = scmp.eq.s32.totalorder %s22, 0
      %p132 = por %p130, %p131
      %p133 = scmp.ne.s32.totalorder %s119, %s120
      %p134 = scmp.eq.s32.totalorder %s23, 1
      %p135 = por %p133, %p134
      %p137 = scmp.ne.s32.totalorder %s120, %s136
      %p138 = scmp.eq.s32.totalorder %s23, 0
      %p139 = por %p137, %p138
      %p140 = scmp.le.s32.totalorder 1, %s17
      %p141 = scmp.lt.s32.totalorder %s17, 3
      %p142 = pnand %p140, %p141
      %p143 = pneg %p142
      // Predicated region
      $region9: #{tpu_custom_call.1} parent=5 // pred_check
        _
      $region10: #{tpu_custom_call.1} parent=5 // pred_check_branch
        %145 = sbr.rel (%p142) target = $region12
      $region11: #{tpu_custom_call.1} parent=5 // pred_region
        %s146 = ssub.s32 %s17, 1
        // Predicated region
        $region13: #{tpu_custom_call.1} parent=11 // pred_check
          %p147 = pneg %p64
        $region14: #{tpu_custom_call.1} parent=11 // pred_check_branch
          %149 = sbr.rel (%p147) target = $region16
        $region15: #{tpu_custom_call.1} parent=11 // pred_region
          %s151 = ssub.s32 256, 256
          %152 = vsyncadd [#allocation6], %s151
          %s154 = sshll.u32 [#allocation5], 4
          %s155 = int_to_ptr.vmem [resolvable:$true] %s154
          %157 = dma.hbm_to_vmem [thread:$0]  %s1, 256, %s155, [#allocation6]
        $region16: #{tpu_custom_call.1} parent=11 // pred_fallthru
          _
        // Predicated region
        $region17: #{tpu_custom_call.1} parent=11 // pred_check
          %p158 = pneg %p85
        $region18: #{tpu_custom_call.1} parent=11 // pred_check_branch
          %160 = sbr.rel (%p158) target = $region20
        $region19: #{tpu_custom_call.1} parent=11 // pred_region
          _
        $region20: #{tpu_custom_call.1} parent=11 // pred_fallthru
          _
        // Predicated region
        $region21: #{tpu_custom_call.1} parent=11 // pred_check
          %p161 = pneg %p106
        $region22: #{tpu_custom_call.1} parent=11 // pred_check_branch
          %163 = sbr.rel (%p161) target = $region24
        $region23: #{tpu_custom_call.1} parent=11 // pred_region
          _
        $region24: #{tpu_custom_call.1} parent=11 // pred_fallthru
          _
      $region12: #{tpu_custom_call.1} parent=5 // pred_fallthru
        _
      %p164 = scmp.lt.s32.totalorder %s17, 2
      // Predicated region
      $region25: #{tpu_custom_call.1} parent=5 // pred_check
        %p165 = pneg %p164
      $region26: #{tpu_custom_call.1} parent=5 // pred_check_branch
        %167 = sbr.rel (%p165) target = $region28
      $region27: #{tpu_custom_call.1} parent=5 // pred_region
        // Predicated region
        $region29: #{tpu_custom_call.1} parent=27 // pred_check
          %p168 = pneg %p37
        $region30: #{tpu_custom_call.1} parent=27 // pred_check_branch
          %170 = sbr.rel (%p168) target = $region32
        $region31: #{tpu_custom_call.1} parent=27 // pred_region
          %s171 = sand.u32 %s27, 1
          %s172 = scalar_lea.sflag [#allocation3], %s171
          %s173 = sand.u32 %s27, 1
          %s174 = smul.addr %s173, 8
          %s175 = scalar_lea.vmem [#allocation2], %s174
          %s177 = ssub.s32 128, 128
          %178 = vsyncadd %s172, %s177
          %s179 = smul.addr %s17, 2
          %s180 = smul.addr %s179, 64
          %s181 = scalar_lea.hbm %s0, %s180
          %s183 = sshll.u32 %s175, 4
          %s184 = int_to_ptr.vmem [resolvable:$true] %s183
          %186 = dma.hbm_to_vmem [thread:$0]  %s181, 128, %s184, %s172
        $region32: #{tpu_custom_call.1} parent=27 // pred_fallthru
          _
      $region28: #{tpu_custom_call.1} parent=5 // pred_fallthru
        _
      %p187 = scmp.le.s32.totalorder 1, %s17
      %p188 = scmp.lt.s32.totalorder %s17, 3
      %p189 = pnand %p187, %p188
      %p190 = pneg %p189
      // Predicated region
      $region33: #{tpu_custom_call.1} parent=5 // pred_check
        _
      $region34: #{tpu_custom_call.1} parent=5 // pred_check_branch
        %192 = sbr.rel (%p189) target = $region36
      $region35: #{tpu_custom_call.1} parent=5 // pred_region
        %s193 = ssub.s32 %s17, 1
        %s194 = sand.u32 %s30, 1
        %s195 = scalar_lea.sflag [#allocation3], %s194
        %s196 = sand.u32 %s30, 1
        %s197 = smul.addr %s196, 8
        %s198 = scalar_lea.vmem [#allocation2], %s197
        // Predicated region
        $region37: #{tpu_custom_call.1} parent=35 // pred_check
          %p199 = pneg %p43
        $region38: #{tpu_custom_call.1} parent=35 // pred_check_branch
          %201 = sbr.rel (%p199) target = $region40
        $region39: #{tpu_custom_call.1} parent=35 // pred_region
          %202 = dma.done %s195, 128
        $region40: #{tpu_custom_call.1} parent=35 // pred_fallthru
          _
        // Predicated region
        $region41: #{tpu_custom_call.1} parent=35 // pred_check
          %p203 = pneg %p64
        $region42: #{tpu_custom_call.1} parent=35 // pred_check_branch
          %205 = sbr.rel (%p203) target = $region44
        $region43: #{tpu_custom_call.1} parent=35 // pred_region
          %206 = dma.done [#allocation6], 256
        $region44: #{tpu_custom_call.1} parent=35 // pred_fallthru
          _
        %s207 = sand.u32 %s30, 1
        %s208 = scalar_lea.sflag [#allocation3], %s207
        %s209 = sand.u32 %s30, 1
        %s210 = smul.addr %s209, 8
        %s211 = scalar_lea.vmem [#allocation2], %s210
        %p212 = pneg %p43
        %p213 = pneg %p40
        %p214 = pneg %p64
        %p215 = pneg %p61
        %p216 = pneg %p85
        %p217 = pneg %p82
        %p218 = pneg %p106
        %p219 = pneg %p103
        %p220 = pneg %p132
        %p221 = pneg %p129
        %s222 = sand.u32 %s119, 1
        %s223 = scalar_lea.sflag [#allocation4], %s222
        %s224 = sand.u32 %s119, 1
        %s225 = smul.addr %s224, 8
        %s226 = scalar_lea.vmem [#allocation7], %s225
        %v227 = vld [vmem:[#allocation5] sm:$0xff]
        %v228 = vld [vmem:[#allocation5 + $0x8] sm:$0xff]
        %v229 = vld [vmem:[%s198] sm:$0xff]
        %v231 = vcombine.high %v229, %v229
        %233 = vrot.lane.b32.xlu0 %v229, 17
        %v234 = vpop.permute.xlu0 %233
        %235 = vrot.lane.b32.xlu0 %v231, 17
        %v236 = vpop.permute.xlu0 %235
        %v237 = vlaneseq
        %v238 = vand.u32 %v237, 127
        %vm239 = vcmp.lt.s32.totalorder %v238, 17
        %v240 = vsel %vm239, %v234, %v236
        %v241 = vsel %vm239, %v236, %v234
        %v242 = vlaneseq
        %v243 = vshrl.u32 %v242, 7
        %v244 = vsub.s32 0, %v243
        %v245 = vrot.slane %v227, %v244
        %v246 = vlaneseq
        %v247 = vshrl.u32 %v246, 7
        %v248 = vsub.s32 0, %v247
        %v249 = vrot.slane %v228, %v248
        %v250 = vmul.f32 %v241, %v245
        %v251 = vmul.f32 %v240, %v249
        %252 = vrot.lane.b32.xlu0 %v229, 16
        %v253 = vpop.permute.xlu0 %252
        %254 = vrot.lane.b32.xlu0 %v231, 16
        %v255 = vpop.permute.xlu0 %254
        %vm256 = vcmp.lt.s32.totalorder %v238, 16
        %v257 = vsel %vm256, %v253, %v255
        %v258 = vsel %vm256, %v255, %v253
        %v259 = vlaneseq
        %v260 = vshrl.u32 %v259, 7
        %v261 = vsub.s32 1, %v260
        %v262 = vrot.slane %v227, %v261
        %v263 = vlaneseq
        %v264 = vshrl.u32 %v263, 7
        %v265 = vsub.s32 1, %v264
        %v266 = vrot.slane %v228, %v265
        %v267 = vmul.f32 %v258, %v262
        %v268 = vmul.f32 %v257, %v266
        %269 = vrot.lane.b32.xlu0 %v229, 15
        %v270 = vpop.permute.xlu0 %269
        %271 = vrot.lane.b32.xlu0 %v231, 15
        %v272 = vpop.permute.xlu0 %271
        %vm273 = vcmp.lt.s32.totalorder %v238, 15
        %v274 = vsel %vm273, %v270, %v272
        %v275 = vsel %vm273, %v272, %v270
        %v276 = vlaneseq
        %v277 = vshrl.u32 %v276, 7
        %v278 = vsub.s32 2, %v277
        %v279 = vrot.slane %v227, %v278
        %v280 = vlaneseq
        %v281 = vshrl.u32 %v280, 7
        %v282 = vsub.s32 2, %v281
        %v283 = vrot.slane %v228, %v282
        %v284 = vmul.f32 %v275, %v279
        %v285 = vmul.f32 %v274, %v283
        %286 = vrot.lane.b32.xlu0 %v229, 1
        %v287 = vpop.permute.xlu0 %286
        %288 = vrot.lane.b32.xlu0 %v231, 1
        %v289 = vpop.permute.xlu0 %288
        %vm290 = vcmp.lt.s32.totalorder %v238, 1
        %v291 = vsel %vm290, %v287, %v289
        %v292 = vsel %vm290, %v289, %v287
        %v293 = vlaneseq
        %v294 = vshrl.u32 %v293, 7
        %v295 = vsub.s32 3, %v294
        %v296 = vrot.slane %v227, %v295
        %v297 = vlaneseq
        %v298 = vshrl.u32 %v297, 7
        %v299 = vsub.s32 3, %v298
        %v300 = vrot.slane %v228, %v299
        %v301 = vmul.f32 %v292, %v296
        %v302 = vmul.f32 %v291, %v300
        %303 = vrot.lane.b32.xlu0 %v229, 127
        %v304 = vpop.permute.xlu0 %303
        %305 = vrot.lane.b32.xlu0 %v231, 127
        %v306 = vpop.permute.xlu0 %305
        %vm307 = vcmp.lt.s32.totalorder %v238, 127
        %v308 = vsel %vm307, %v304, %v306
        %v309 = vsel %vm307, %v306, %v304
        %v310 = vlaneseq
        %v311 = vshrl.u32 %v310, 7
        %v312 = vsub.s32 4, %v311
        %v313 = vrot.slane %v227, %v312
        %v314 = vlaneseq
        %v315 = vshrl.u32 %v314, 7
        %v316 = vsub.s32 4, %v315
        %v317 = vrot.slane %v228, %v316
        %v318 = vmul.f32 %v308, %v313
        %v319 = vmul.f32 %v309, %v317
        %320 = vrot.lane.b32.xlu0 %v229, 113
        %v321 = vpop.permute.xlu0 %320
        %322 = vrot.lane.b32.xlu0 %v231, 113
        %v323 = vpop.permute.xlu0 %322
        %vm324 = vcmp.lt.s32.totalorder %v238, 113
        %v325 = vsel %vm324, %v321, %v323
        %v326 = vsel %vm324, %v323, %v321
        %v327 = vlaneseq
        %v328 = vshrl.u32 %v327, 7
        %v329 = vsub.s32 5, %v328
        %v330 = vrot.slane %v227, %v329
        %v331 = vlaneseq
        %v332 = vshrl.u32 %v331, 7
        %v333 = vsub.s32 5, %v332
        %v334 = vrot.slane %v228, %v333
        %v335 = vmul.f32 %v325, %v330
        %v336 = vmul.f32 %v326, %v334
        %337 = vrot.lane.b32.xlu0 %v229, 112
        %v338 = vpop.permute.xlu0 %337
        %339 = vrot.lane.b32.xlu0 %v231, 112
        %v340 = vpop.permute.xlu0 %339
        %vm341 = vcmp.lt.s32.totalorder %v238, 112
        %v342 = vsel %vm341, %v338, %v340
        %v343 = vsel %vm341, %v340, %v338
        %v344 = vlaneseq
        %v345 = vshrl.u32 %v344, 7
        %v346 = vsub.s32 6, %v345
        %v347 = vrot.slane %v227, %v346
        %v348 = vlaneseq
        %v349 = vshrl.u32 %v348, 7
        %v350 = vsub.s32 6, %v349
        %v351 = vrot.slane %v228, %v350
        %v352 = vmul.f32 %v342, %v347
        %v353 = vmul.f32 %v343, %v351
        %354 = vrot.lane.b32.xlu0 %v229, 111
        %v355 = vpop.permute.xlu0 %354
        %356 = vrot.lane.b32.xlu0 %v231, 111
        %v357 = vpop.permute.xlu0 %356
        %vm358 = vcmp.lt.s32.totalorder %v238, 111
        %v359 = vsel %vm358, %v355, %v357
        %v360 = vsel %vm358, %v357, %v355
        %v361 = vlaneseq
        %v362 = vshrl.u32 %v361, 7
        %v363 = vsub.s32 7, %v362
        %v364 = vrot.slane %v227, %v363
        %v365 = vlaneseq
        %v366 = vshrl.u32 %v365, 7
        %v367 = vsub.s32 7, %v366
        %v368 = vrot.slane %v228, %v367
        %v369 = vmul.f32 %v359, %v364
        %v370 = vmul.f32 %v360, %v368
        %v373 = vrot.slane %v267, 4
        %v374 = vrot.slane %v268, 4
        %v379 = vrot.slane %v301, 4
        %v380 = vrot.slane %v302, 4
        %v385 = vrot.slane %v318, 4
        %v386 = vrot.slane %v319, 4
        %v391 = vrot.slane %v352, 4
        %v392 = vrot.slane %v353, 4
        %vm395 = vcmask 1043456
        %v396 = vsel %vm395, %v250, %v373
        %v397 = vsel %vm395, %v251, %v374
        %v398 = vsel %vm395, %v284, %v379
        %v399 = vsel %vm395, %v285, %v380
        %v400 = vsel %vm395, %v229, %v385
        %v401 = vsel %vm395, %v231, %v386
        %v402 = vsel %vm395, %v335, %v391
        %v403 = vsel %vm395, %v336, %v392
        %v404 = vsel %vm395, %v369, 1.0
        %v405 = vsel %vm395, %v370, 1.0
        %v406 = vld [vmem:[%s2] sm:$0xf]
        %vm407 = vcmask 302080
        %v409 = vsel %vm407, %v406, 0
        %vm411 = vcmask 1044480
        %v413 = vsel %vm411, %v404, 0
        %v416 = vsel %vm411, %v405, 0
        %418 = vmatprep.subr.mxu0 %v397
        %419 = vmatpush1.msra.mxu0 %v396
        %420 = vmatprep.subr.mxu0 %v399
        %421 = vmatpush1.msra.mxu0 %v398
        %422 = vmatprep.subr.mxu0 %v401
        %423 = vmatpush1.msra.mxu0 %v400
        %424 = vmatprep.subr.mxu0 %v403
        %425 = vmatpush1.msra.mxu0 %v402
        %426 = vmatprep.subr.mxu0 %v416
        %427 = vmatpush1.msra.mxu0 %v413
        %428 = vmatprep.subr.mxu0 0.0
        %429 = vmatpush1.msra.mxu0 0.0
        %430 = vmatprep.subr.mxu0 0.0
        %431 = vmatpush1.msra.mxu0 0.0
        %432 = vmatprep.subr.mxu0 0.0
        %433 = vmatpush1.msra.mxu0 0.0
        %434 = vmatprep.subr.mxu0 0.0
        %435 = vmatpush1.msra.mxu0 0.0
        %436 = vmatprep.subr.mxu0 0.0
        %437 = vmatpush1.msra.mxu0 0.0
        %438 = vmatprep.subr.mxu0 0.0
        %439 = vmatpush1.msra.mxu0 0.0
        %440 = vmatprep.subr.mxu0 0.0
        %441 = vmatpush1.msra.mxu0 0.0
        %442 = vmatprep.subr.mxu0 0.0
        %443 = vmatpush1.msra.mxu0 0.0
        %444 = vmatprep.subr.mxu0 0.0
        %445 = vmatpush1.msra.mxu0 0.0
        %446 = vmatprep.subr.mxu0 0.0
        %447 = vmatpush1.msra.mxu0 0.0
        %448 = vmatprep.subr.mxu0 0.0
        %449 = vmatpush1.msra.mxu0 0.0
        %450 = vmatprep.subr.mxu0 0.0
        %451 = vmatpush1.msra.mxu0 0.0
        %452 = vmatprep.subr.mxu0 0.0
        %453 = vmatpush1.msra.mxu0 0.0
        %454 = vmatprep.subr.mxu0 0.0
        %455 = vmatpush1.msra.mxu0 0.0
        %456 = vmatprep.subr.mxu0 0.0
        %457 = vmatpush1.msra.mxu0 0.0
        %458 = vmatprep.subr.mxu0 0.0
        %459 = vmatpush1.msra.mxu0 0.0
        %460 = vmatprep.subr.mxu0 0.0
        %461 = vmatpush1.msra.mxu0 0.0
        %462 = vmatprep.subr.mxu0 0.0
        %463 = vmatpush1.msra.mxu0 0.0
        %464 = vmatprep.subr.mxu0 0.0
        %465 = vmatpush1.msra.mxu0 0.0
        %466 = vmatprep.subr.mxu0 0.0
        %467 = vmatpush1.msra.mxu0 0.0
        %468 = vmatprep.subr.mxu0 0.0
        %469 = vmatpush1.msra.mxu0 0.0
        %470 = vmatprep.subr.mxu0 0.0
        %471 = vmatpush1.msra.mxu0 0.0
        %472 = vmatprep.subr.mxu0 0.0
        %473 = vmatpush1.msra.mxu0 0.0
        %474 = vmatprep.subr.mxu0 0.0
        %475 = vmatpush1.msra.mxu0 0.0
        %476 = vmatprep.subr.mxu0 0.0
        %477 = vmatpush1.msra.mxu0 0.0
        %478 = vmatprep.subr.mxu0 0.0
        %479 = vmatpush1.msra.mxu0 0.0
        %480 = vmatprep.subr.mxu0 0.0
        %481 = vmatpush1.msra.mxu0 0.0
        %482 = vmatprep.mubr.f32.mxu0 0.0
        %483 = vmatmul.mubr.f32.gmra.mrb[0].mxu0 %v409
        %v484 = vpop.f32.mrb[0].mxu0
        %v485 = vadd.f32 0.0, %v484
        %v486 = vpop.f32.mrb[0].mxu0
        %v487 = vadd.f32 0.0, %v486
        %488 = vdwg.mxu0
        %v489 = vmul.f32 %v485, %v485
        %v490 = vmul.f32 %v487, %v487
        %v493 = vrot.slane %v489, 4
        %v494 = vrot.slane %v490, 4
        %v497 = vsel %vm395, %v485, %v493
        %v498 = vsel %vm395, %v487, %v494
        %v499 = vadd.f32 %v497, %v498
        %500 = vadd.xlane.f32.xlu0 %v499
        %v501 = vpop.xlane.xlu0 %500
        %v502 = vmul.f32 %v501, 0.00390625
        %v503 = vmul.f32 %v502, %v502
        %v505 = vrot.slane %v503, 4
        %v507 = vsub.f32 %v502, %v505
        %v508 = vsub.f32 %v485, %v502
        %v509 = vsub.f32 %v487, %v502
        %v510 = vadd.f32 %v507, 1e-05
        %v511 = vrsqrt.pop %v510
        %513 = vset.pattern.permute.xlu0 0
        %514 = vperm.xlu0 %513, %v511
        %v515 = vpop.permute.xlu0 %514
        %v516 = vrot.slane %v515, 4
        %v518 = vmul.f32 %v508, %v516
        %v519 = vmul.f32 %v509, %v516
        %v520 = vmax.f32 %v518, 0.0
        %v521 = vmax.f32 %v519, 0.0
        %522 = vrot.lane.b32.xlu0 %v520, 17
        %v523 = vpop.permute.xlu0 %522
        %524 = vrot.lane.b32.xlu0 %v521, 17
        %v525 = vpop.permute.xlu0 %524
        %v526 = vsel %vm239, %v523, %v525
        %v527 = vsel %vm239, %v525, %v523
        %v528 = vmul.f32 %v527, %v245
        %v529 = vmul.f32 %v526, %v249
        %530 = vrot.lane.b32.xlu0 %v520, 16
        %v531 = vpop.permute.xlu0 %530
        %532 = vrot.lane.b32.xlu0 %v521, 16
        %v533 = vpop.permute.xlu0 %532
        %v534 = vsel %vm256, %v531, %v533
        %v535 = vsel %vm256, %v533, %v531
        %v536 = vmul.f32 %v535, %v262
        %v537 = vmul.f32 %v534, %v266
        %538 = vrot.lane.b32.xlu0 %v520, 15
        %v539 = vpop.permute.xlu0 %538
        %540 = vrot.lane.b32.xlu0 %v521, 15
        %v541 = vpop.permute.xlu0 %540
        %v542 = vsel %vm273, %v539, %v541
        %v543 = vsel %vm273, %v541, %v539
        %v544 = vmul.f32 %v543, %v279
        %v545 = vmul.f32 %v542, %v283
        %546 = vrot.lane.b32.xlu0 %v520, 1
        %v547 = vpop.permute.xlu0 %546
        %548 = vrot.lane.b32.xlu0 %v521, 1
        %v549 = vpop.permute.xlu0 %548
        %v550 = vsel %vm290, %v547, %v549
        %v551 = vsel %vm290, %v549, %v547
        %v552 = vmul.f32 %v551, %v296
        %v553 = vmul.f32 %v550, %v300
        %554 = vrot.lane.b32.xlu0 %v520, 127
        %v555 = vpop.permute.xlu0 %554
        %556 = vrot.lane.b32.xlu0 %v521, 127
        %v557 = vpop.permute.xlu0 %556
        %v558 = vsel %vm307, %v555, %v557
        %v559 = vsel %vm307, %v557, %v555
        %v560 = vmul.f32 %v558, %v313
        %v561 = vmul.f32 %v559, %v317
        %562 = vrot.lane.b32.xlu0 %v520, 113
        %v563 = vpop.permute.xlu0 %562
        %564 = vrot.lane.b32.xlu0 %v521, 113
        %v565 = vpop.permute.xlu0 %564
        %v566 = vsel %vm324, %v563, %v565
        %v567 = vsel %vm324, %v565, %v563
        %v568 = vmul.f32 %v566, %v330
        %v569 = vmul.f32 %v567, %v334
        %570 = vrot.lane.b32.xlu0 %v520, 112
        %v571 = vpop.permute.xlu0 %570
        %572 = vrot.lane.b32.xlu0 %v521, 112
        %v573 = vpop.permute.xlu0 %572
        %v574 = vsel %vm341, %v571, %v573
        %v575 = vsel %vm341, %v573, %v571
        %v576 = vmul.f32 %v574, %v347
        %v577 = vmul.f32 %v575, %v351
        %578 = vrot.lane.b32.xlu0 %v520, 111
        %v579 = vpop.permute.xlu0 %578
        %580 = vrot.lane.b32.xlu0 %v521, 111
        %v581 = vpop.permute.xlu0 %580
        %v582 = vsel %vm358, %v579, %v581
        %v583 = vsel %vm358, %v581, %v579
        %v584 = vmul.f32 %v582, %v364
        %v585 = vmul.f32 %v583, %v368
        %v588 = vrot.slane %v536, 4
        %v589 = vrot.slane %v537, 4
        %v594 = vrot.slane %v552, 4
        %v595 = vrot.slane %v553, 4
        %v600 = vrot.slane %v560, 4
        %v601 = vrot.slane %v561, 4
        %v606 = vrot.slane %v576, 4
        %v607 = vrot.slane %v577, 4
        %v610 = vsel %vm395, %v528, %v588
        %v611 = vsel %vm395, %v529, %v589
        %v612 = vsel %vm395, %v544, %v594
        %v613 = vsel %vm395, %v545, %v595
        %v614 = vsel %vm395, %v520, %v600
        %v615 = vsel %vm395, %v521, %v601
        %v616 = vsel %vm395, %v568, %v606
        %v617 = vsel %vm395, %v569, %v607
        %v618 = vsel %vm395, %v584, 1.0
        %v619 = vsel %vm395, %v585, 1.0
        %v620 = vld [vmem:[%s3] sm:$0xf]
        %v622 = vsel %vm407, %v620, 0
        %v625 = vsel %vm411, %v618, 0
        %v628 = vsel %vm411, %v619, 0
        %630 = vmatprep.subr.mxu0 %v611
        %631 = vmatpush1.msra.mxu0 %v610
        %632 = vmatprep.subr.mxu0 %v613
        %633 = vmatpush1.msra.mxu0 %v612
        %634 = vmatprep.subr.mxu0 %v615
        %635 = vmatpush1.msra.mxu0 %v614
        %636 = vmatprep.subr.mxu0 %v617
        %637 = vmatpush1.msra.mxu0 %v616
        %638 = vmatprep.subr.mxu0 %v628
        %639 = vmatpush1.msra.mxu0 %v625
        %640 = vmatprep.subr.mxu0 0.0
        %641 = vmatpush1.msra.mxu0 0.0
        %642 = vmatprep.subr.mxu0 0.0
        %643 = vmatpush1.msra.mxu0 0.0
        %644 = vmatprep.subr.mxu0 0.0
        %645 = vmatpush1.msra.mxu0 0.0
        %646 = vmatprep.subr.mxu0 0.0
        %647 = vmatpush1.msra.mxu0 0.0
        %648 = vmatprep.subr.mxu0 0.0
        %649 = vmatpush1.msra.mxu0 0.0
        %650 = vmatprep.subr.mxu0 0.0
        %651 = vmatpush1.msra.mxu0 0.0
        %652 = vmatprep.subr.mxu0 0.0
        %653 = vmatpush1.msra.mxu0 0.0
        %654 = vmatprep.subr.mxu0 0.0
        %655 = vmatpush1.msra.mxu0 0.0
        %656 = vmatprep.subr.mxu0 0.0
        %657 = vmatpush1.msra.mxu0 0.0
        %658 = vmatprep.subr.mxu0 0.0
        %659 = vmatpush1.msra.mxu0 0.0
        %660 = vmatprep.subr.mxu0 0.0
        %661 = vmatpush1.msra.mxu0 0.0
        %662 = vmatprep.subr.mxu0 0.0
        %663 = vmatpush1.msra.mxu0 0.0
        %664 = vmatprep.subr.mxu0 0.0
        %665 = vmatpush1.msra.mxu0 0.0
        %666 = vmatprep.subr.mxu0 0.0
        %667 = vmatpush1.msra.mxu0 0.0
        %668 = vmatprep.subr.mxu0 0.0
        %669 = vmatpush1.msra.mxu0 0.0
        %670 = vmatprep.subr.mxu0 0.0
        %671 = vmatpush1.msra.mxu0 0.0
        %672 = vmatprep.subr.mxu0 0.0
        %673 = vmatpush1.msra.mxu0 0.0
        %674 = vmatprep.subr.mxu0 0.0
        %675 = vmatpush1.msra.mxu0 0.0
        %676 = vmatprep.subr.mxu0 0.0
        %677 = vmatpush1.msra.mxu0 0.0
        %678 = vmatprep.subr.mxu0 0.0
        %679 = vmatpush1.msra.mxu0 0.0
        %680 = vmatprep.subr.mxu0 0.0
        %681 = vmatpush1.msra.mxu0 0.0
        %682 = vmatprep.subr.mxu0 0.0
        %683 = vmatpush1.msra.mxu0 0.0
        %684 = vmatprep.subr.mxu0 0.0
        %685 = vmatpush1.msra.mxu0 0.0
        %686 = vmatprep.subr.mxu0 0.0
        %687 = vmatpush1.msra.mxu0 0.0
        %688 = vmatprep.subr.mxu0 0.0
        %689 = vmatpush1.msra.mxu0 0.0
        %690 = vmatprep.subr.mxu0 0.0
        %691 = vmatpush1.msra.mxu0 0.0
        %692 = vmatprep.subr.mxu0 0.0
        %693 = vmatpush1.msra.mxu0 0.0
        %694 = vmatprep.mubr.f32.mxu0 0.0
        %695 = vmatmul.mubr.f32.gmra.mrb[0].mxu0 %v622
        %v696 = vpop.f32.mrb[0].mxu0
        %v697 = vadd.f32 0.0, %v696
        %v698 = vpop.f32.mrb[0].mxu0
        %v699 = vadd.f32 0.0, %v698
        %700 = vdwg.mxu0
        %v701 = vmul.f32 %v697, %v697
        %v702 = vmul.f32 %v699, %v699
        %v705 = vrot.slane %v701, 4
        %v706 = vrot.slane %v702, 4
        %v709 = vsel %vm395, %v697, %v705
        %v710 = vsel %vm395, %v699, %v706
        %v711 = vadd.f32 %v709, %v710
        %712 = vadd.xlane.f32.xlu0 %v711
        %v713 = vpop.xlane.xlu0 %712
        %v714 = vmul.f32 %v713, 0.00390625
        %v715 = vmul.f32 %v714, %v714
        %v717 = vrot.slane %v715, 4
        %v719 = vsub.f32 %v714, %v717
        %v720 = vsub.f32 %v697, %v714
        %v721 = vsub.f32 %v699, %v714
        %v722 = vadd.f32 %v719, 1e-05
        %v723 = vrsqrt.pop %v722
        %725 = vset.pattern.permute.xlu0 0
        %726 = vperm.xlu0 %725, %v723
        %v727 = vpop.permute.xlu0 %726
        %v728 = vrot.slane %v727, 4
        %v730 = vmul.f32 %v720, %v728
        %v731 = vmul.f32 %v721, %v728
        %v732 = vmax.f32 %v730, 0.0
        %v733 = vmax.f32 %v731, 0.0
        %v734 = vadd.f32 %v732, %v229
        %v735 = vadd.f32 %v733, %v231
        %v736 = vmax.f32 %v734, 0.0
        %v737 = vmax.f32 %v735, 0.0
        %v740 = vcombine.low %v736, %v737
        %742 = vst [vmem:[%s226] sm:$0xff] %v740
        %s743 = sand.u32 %s119, 1
        %s744 = scalar_lea.sflag [#allocation4], %s743
        %s745 = sand.u32 %s119, 1
        %s746 = smul.addr %s745, 8
        %s747 = scalar_lea.vmem [#allocation7], %s746
        // Predicated region
        $region45: #{tpu_custom_call.1} parent=35 // pred_check
          %p748 = pneg %p129
        $region46: #{tpu_custom_call.1} parent=35 // pred_check_branch
          %750 = sbr.rel (%p748) target = $region48
        $region47: #{tpu_custom_call.1} parent=35 // pred_region
          %s752 = ssub.s32 128, 128
          %753 = vsyncadd %s744, %s752
          %s754 = smul.addr %s22, 2
          %s755 = smul.addr %s754, 64
          %s756 = scalar_lea.hbm %s4, %s755
          %s758 = sshll.u32 %s747, 4
          %s759 = int_to_ptr.vmem [resolvable:$true] %s758
          %761 = dma.vmem_to_hbm [thread:$0]  %s759, 128, %s756, %s744
        $region48: #{tpu_custom_call.1} parent=35 // pred_fallthru
          _
      $region36: #{tpu_custom_call.1} parent=5 // pred_fallthru
        _
      %p762 = scmp.le.s32.totalorder 2, %s17
      // Predicated region
      $region49: #{tpu_custom_call.1} parent=5 // pred_check
        %p763 = pneg %p762
      $region50: #{tpu_custom_call.1} parent=5 // pred_check_branch
        %765 = sbr.rel (%p763) target = $region52
      $region51: #{tpu_custom_call.1} parent=5 // pred_region
        %s766 = ssub.s32 %s17, 2
        // Predicated region
        $region53: #{tpu_custom_call.1} parent=51 // pred_check
          %p767 = pneg %p135
        $region54: #{tpu_custom_call.1} parent=51 // pred_check_branch
          %769 = sbr.rel (%p767) target = $region56
        $region55: #{tpu_custom_call.1} parent=51 // pred_region
          %s770 = sand.u32 %s120, 1
          %s771 = scalar_lea.sflag [#allocation4], %s770
          %s772 = sand.u32 %s120, 1
          %s773 = smul.addr %s772, 8
          %s774 = scalar_lea.vmem [#allocation7], %s773
          %775 = dma.done %s771, 128
        $region56: #{tpu_custom_call.1} parent=51 // pred_fallthru
          _
      $region52: #{tpu_custom_call.1} parent=5 // pred_fallthru
        _
    $region6: #{tpu_custom_call.1} parent=1 // loop_footer
      %s21 = sadd.s32 1, %s17
    $region7: #{tpu_custom_call.1} parent=1 // loop_footer_branch
      %16 = sbr.rel target = $region3
    $region8: #{tpu_custom_call.1} parent=1 // loop_exit
      _
    %776 = vsyncpa [#allocation3], 1
    %s777 = scalar_lea.sflag [#allocation3], 1
    %778 = vsyncpa %s777, 1
    %779 = vsyncpa [#allocation6], 1
    %780 = vsyncpa [#allocation4], 1
    %s781 = scalar_lea.sflag [#allocation4], 1
    %782 = vsyncpa %s781, 1

</llo_original>
